<compile_context>
chip_gen: v6e
topology: v6e:2x2x1
jax: 0.10.0
libtpu: 0.0.40
codegen_flags: <defaults>
</compile_context>

<pallas_src>
import functools

import jax
import jax.numpy as jnp
from jax.experimental import pallas as pl
from jax.experimental.pallas import tpu as pltpu

NUM_NEURONS = 256


def _ngram_kernel(ids_ref, w1f_ref, b1_ref, w2_ref, b2_ref, out_ref):
    # ids_ref : (tile_m, ctx)     int32
    # w1f_ref : (ctx*vocab, 256)  bf16   (embedding table pre-folded into W1)
    # b1_ref  : (1, 256)          f32
    # w2_ref  : (256, vocab)      bf16
    # b2_ref  : (1, vocab)        f32
    # out_ref : (tile_m, vocab)   f32 (or bf16)
    tile_m, ctx = ids_ref.shape
    kdim = w1f_ref.shape[0]                 # ctx * vocab
    vocab = kdim // ctx
    cdt = w1f_ref.dtype                     # MXU compute dtype (bf16)

    # (1, ctx*vocab) iota, broadcast against (tile_m, 1) id columns.
    iota = jax.lax.broadcasted_iota(jnp.int32, (1, kdim), 1)

    # One-hot over the folded K axis: context column c selects key c*vocab+id.
    # Blocks are disjoint, so the sum has exactly `ctx` ones per row.
    onehot = jnp.zeros((tile_m, kdim), cdt)
    for c in range(ctx):                    # static unroll, ctx is small
        key_c = ids_ref[:, c:c + 1] + c * vocab          # (tile_m, 1)
        onehot = onehot + (key_c == iota).astype(cdt)

    # Layer 1: single K=ctx*vocab, N=256 bf16 GEMM (f32 accumulate) + ReLU.
    h = jnp.dot(onehot, w1f_ref[...], preferred_element_type=jnp.float32)
    h = jnp.maximum(h + b1_ref[...], 0.0)

    # Layer 2 + numerically stable log-softmax over the vocab (lane) axis.
    logits = jnp.dot(h.astype(w2_ref.dtype), w2_ref[...],
                     preferred_element_type=jnp.float32) + b2_ref[...]
    m = jnp.max(logits, axis=-1, keepdims=True)
    shifted = logits - m
    lse = jnp.log(jnp.sum(jnp.exp(shifted), axis=-1, keepdims=True))
    out_ref[...] = (shifted - lse).astype(out_ref.dtype)


def prepare_params(emb_table, w1, b1, w2, b2, param_dtype=jnp.bfloat16):
    """One-time parameter prep (hoisted out of the per-call path).

    Folds the embedding table into the first Linear (emb @ W1^T per context
    slot, stacked along K), transposes the second Linear, reshapes biases to
    2-D rows, and casts the MXU operands to `param_dtype` (bf16).  Keep the
    folded matrix in f32 (param_dtype=jnp.float32) if tolerances ever tighten.
    """
    emb = jnp.asarray(emb_table, jnp.float32)            # (vocab, emb_dim)
    w1 = jnp.asarray(w1, jnp.float32)                    # (256, ctx*emb_dim)
    vocab, emb_dim = emb.shape
    ctx = w1.shape[1] // emb_dim
    w1_t = w1.T                                          # (ctx*emb_dim, 256)
    w1_fold = jnp.concatenate(                           # (ctx*vocab, 256) f32
        [emb @ w1_t[c * emb_dim:(c + 1) * emb_dim, :] for c in range(ctx)],
        axis=0)
    return dict(
        w1_fold=w1_fold.astype(param_dtype),             # (ctx*vocab, 256)
        b1=jnp.asarray(b1, jnp.float32).reshape(1, -1),  # (1, 256)
        w2_t=jnp.asarray(w2, jnp.float32).T.astype(param_dtype),  # (256, vocab)
        b2=jnp.asarray(b2, jnp.float32).reshape(1, -1),  # (1, vocab)
    )


def _default_tile_m(batch):
    """Largest reasonable M tile: amortize per-grid-step overhead, but keep
    >=2 grid steps when the batch allows it (v7x has 2 TensorCores sharing the
    'parallel' grid axis); cap at 1024 rows (VMEM is a non-issue here)."""
    b8 = max(8, pl.cdiv(batch, 8) * 8)
    if b8 <= 8:
        return 8
    half = pl.cdiv(pl.cdiv(b8, 2), 8) * 8
    return int(min(1024, max(8, half)))


@functools.partial(jax.jit, static_argnames=("tile_m", "out_dtype"))
def ngram_forward(ids, params, *, tile_m=None, out_dtype=jnp.float32):
    """Batched NGramLanguageModeler forward.

    ids:    (B, context_size) int32 token ids (B=1 reproduces the module).
    params: output of prepare_params().
    returns (B, vocab) log-probabilities in `out_dtype`.
    """
    w1_fold, b1, w2_t, b2 = (params["w1_fold"], params["b1"],
                             params["w2_t"], params["b2"])
    B, ctx = ids.shape
    kdim, n_hidden = w1_fold.shape
    vocab = w2_t.shape[1]

    if tile_m is None:
        tile_m = _default_tile_m(B)

    ids = ids.astype(jnp.int32)
    b_pad = pl.cdiv(B, tile_m) * tile_m
    if b_pad != B:
        # TODO(synk): for very large B, handle the ragged last tile in-kernel
        # instead of materializing a padded copy + slice in HBM.
        ids = jnp.pad(ids, ((0, b_pad - B), (0, 0)))

    out_itemsize = jnp.dtype(out_dtype).itemsize
    cost = pl.CostEstimate(
        flops=2 * b_pad * (kdim * n_hidden + n_hidden * vocab),
        transcendentals=b_pad * (vocab + 1),
        bytes_accessed=(b_pad * ctx * 4
                        + w1_fold.size * w1_fold.dtype.itemsize
                        + w2_t.size * w2_t.dtype.itemsize
                        + (b1.size + b2.size) * 4
                        + b_pad * vocab * out_itemsize),
    )

    full = lambda a: pl.BlockSpec(a.shape, lambda i: (0, 0))  # whole-array block

    out = pl.pallas_call(
        _ngram_kernel,
        out_shape=jax.ShapeDtypeStruct((b_pad, vocab), out_dtype),
        grid=(b_pad // tile_m,),
        in_specs=[
            pl.BlockSpec((tile_m, ctx), lambda i: (i, 0)),     # ids (tiled on B)
            full(w1_fold), full(b1), full(w2_t), full(b2),     # resident weights
        ],
        out_specs=pl.BlockSpec((tile_m, vocab), lambda i: (i, 0)),
        compiler_params=pltpu.CompilerParams(
            dimension_semantics=("parallel",)),                # 2 TCs on v7x
        cost_estimate=cost,
    )(ids, w1_fold, b1, w2_t, b2)
    return out[:B] if b_pad != B else out


def _reference_folded(ids, params):
    """Plain-JAX forward using the same folded / bf16-rounded parameters."""
    w1_fold = params["w1_fold"].astype(jnp.float32)
    vocab = params["w2_t"].shape[1]
    B, ctx = ids.shape
    keys = ids + jnp.arange(ctx, dtype=ids.dtype)[None, :] * vocab
    rows = jnp.take(w1_fold, keys.reshape(-1), axis=0).reshape(B, ctx, -1)
    h = jnp.maximum(rows.sum(axis=1) + params["b1"], 0.0)
    logits = jnp.dot(h.astype(params["w2_t"].dtype), params["w2_t"],
                     preferred_element_type=jnp.float32) + params["b2"]
    return jax.nn.log_softmax(logits, axis=-1)


def _reference_f32(ids, emb_table, w1, b1, w2, b2):
    """Original-module math in full f32 (no bf16 parameter rounding)."""
    B = ids.shape[0]
    embeds = jnp.take(emb_table, ids.reshape(-1), axis=0).reshape(B, -1)
    h = jnp.maximum(embeds @ w1.T + b1, 0.0)
    logits = h @ w2.T + b2
    return jax.nn.log_softmax(logits, axis=-1)


if __name__ == "__main__":
    vocab_size = 128
    embedding_dim = 16
    context_size = 2            # trigram model: 2 context words -> 1 target
    batch = 256                 # batched forward; auto tile_m=128 -> 2 grid steps

    key = jax.random.PRNGKey(0)
    k_emb, k_w1, k_b1, k_w2, k_b2, k_in = jax.random.split(key, 6)

    # Deterministic parameter init (shapes match the nn.Module's __init__).
    emb_table = jax.random.normal(k_emb, (vocab_size, embedding_dim), jnp.float32)
    w1 = jax.random.normal(
        k_w1, (NUM_NEURONS, context_size * embedding_dim), jnp.float32) * 0.05
    b1 = jax.random.normal(k_b1, (NUM_NEURONS,), jnp.float32) * 0.05
    w2 = jax.random.normal(k_w2, (vocab_size, NUM_NEURONS), jnp.float32) * 0.05
    b2 = jax.random.normal(k_b2, (vocab_size,), jnp.float32) * 0.05

    ids = jax.random.randint(k_in, (batch, context_size), 0, vocab_size, jnp.int32)

    params = prepare_params(emb_table, w1, b1, w2, b2)   # one-time prep (fold)

    out = jax.block_until_ready(ngram_forward(ids, params))
    assert out.shape == (batch, vocab_size)

    ref = _reference_folded(ids, params)
    assert jnp.allclose(out, ref, atol=5e-3, rtol=5e-3), "mismatch vs folded ref"
    ref32 = _reference_f32(ids, emb_table, w1, b1, w2, b2)
    assert jnp.allclose(out, ref32, atol=3e-2, rtol=3e-2), "mismatch vs f32 ref"
    # log_softmax rows should sum (in prob space) to ~1
    assert jnp.allclose(jnp.sum(jnp.exp(out), axis=-1), 1.0, atol=1e-3)

    # Explicit tile override (single grid step; exercises the tile_m knob).
    out_big = jax.block_until_ready(ngram_forward(ids, params, tile_m=256))
    assert jnp.allclose(out_big, ref, atol=5e-3, rtol=5e-3)

    # Single-example path (matches the original module's (1, vocab) output).
    out1 = jax.block_until_ready(ngram_forward(ids[:1], params))
    assert out1.shape == (1, vocab_size)
    assert jnp.allclose(out1, ref[:1], atol=5e-3, rtol=5e-3)

    print("KERNEL_OK")
</pallas_src>

<mosaic_0001>
module attributes {stable_mosaic.version = 11 : i64} {
  func.func @_ngram_kernel(%arg0: i32, %arg1: memref<128x2xi32, #tpu.memory_space<vmem>>, %arg2: memref<256x256xbf16, #tpu.memory_space<vmem>>, %arg3: memref<1x256xf32, #tpu.memory_space<vmem>>, %arg4: memref<256x128xbf16, #tpu.memory_space<vmem>>, %arg5: memref<1x128xf32, #tpu.memory_space<vmem>>, %arg6: memref<128x128xf32, #tpu.memory_space<vmem>>) attributes {dimension_semantics = [#tpu.dimension_semantics<parallel>], iteration_bounds = array<i64: 2>, scalar_prefetch = 0 : i64, scratch_operands = 0 : i64, tpu.core_type = #tpu.core_type<tc>, window_params = [{transform_indices = @transform_0, window_bounds = array<i64: 128, 2>}, {pipeline_mode = #tpu.pipeline_mode<synchronous>, transform_indices = @transform_1, window_bounds = array<i64: 256, 256>}, {pipeline_mode = #tpu.pipeline_mode<synchronous>, transform_indices = @transform_2, window_bounds = array<i64: 1, 256>}, {pipeline_mode = #tpu.pipeline_mode<synchronous>, transform_indices = @transform_3, window_bounds = array<i64: 256, 128>}, {pipeline_mode = #tpu.pipeline_mode<synchronous>, transform_indices = @transform_4, window_bounds = array<i64: 1, 128>}, {transform_indices = @transform_5, window_bounds = array<i64: 128, 128>}]} {
    %0 = tpu.iota {dimensions = array<i32: 1>} : vector<1x256xi32>
    %cst = arith.constant 0.000000e+00 : bf16
    %1 = vector.broadcast %cst : bf16 to vector<128x256xbf16>
    %c0 = arith.constant 0 : index
    %c0_0 = arith.constant 0 : index
    %2 = vector.load %arg1[%c0, %c0_0] : memref<128x2xi32, #tpu.memory_space<vmem>>, vector<128x1xi32>
    %c0_i32 = arith.constant 0 : i32
    %3 = vector.broadcast %c0_i32 : i32 to vector<128x1xi32>
    %4 = arith.addi %2, %3 : vector<128x1xi32>
    %5 = vector.broadcast %4 : vector<128x1xi32> to vector<128x256xi32>
    %6 = vector.broadcast %0 : vector<1x256xi32> to vector<128x256xi32>
    %7 = arith.cmpi eq, %5, %6 : vector<128x256xi32>
    %8 = arith.extui %7 : vector<128x256xi1> to vector<128x256xi32>
    %9 = arith.sitofp %8 : vector<128x256xi32> to vector<128x256xf32>
    %10 = arith.truncf %9 : vector<128x256xf32> to vector<128x256xbf16>
    %11 = arith.addf %1, %10 : vector<128x256xbf16>
    %c0_1 = arith.constant 0 : index
    %c1 = arith.constant 1 : index
    %12 = vector.load %arg1[%c0_1, %c1] : memref<128x2xi32, #tpu.memory_space<vmem>>, vector<128x1xi32>
    %c128_i32 = arith.constant 128 : i32
    %13 = vector.broadcast %c128_i32 : i32 to vector<128x1xi32>
    %14 = arith.addi %12, %13 : vector<128x1xi32>
    %15 = vector.broadcast %14 : vector<128x1xi32> to vector<128x256xi32>
    %16 = vector.broadcast %0 : vector<1x256xi32> to vector<128x256xi32>
    %17 = arith.cmpi eq, %15, %16 : vector<128x256xi32>
    %18 = arith.extui %17 : vector<128x256xi1> to vector<128x256xi32>
    %19 = arith.sitofp %18 : vector<128x256xi32> to vector<128x256xf32>
    %20 = arith.truncf %19 : vector<128x256xf32> to vector<128x256xbf16>
    %21 = arith.addf %11, %20 : vector<128x256xbf16>
    %c0_2 = arith.constant 0 : index
    %c0_3 = arith.constant 0 : index
    %22 = vector.load %arg2[%c0_2, %c0_3] : memref<256x256xbf16, #tpu.memory_space<vmem>>, vector<256x256xbf16>
    %cst_4 = arith.constant dense<0.000000e+00> : vector<128x256xf32>
    %23 = tpu.matmul %21, %22, %cst_4 {dimension_numbers = #tpu.dot_dimension_numbers<[1], [0], [0], [1], [0, 0, 1, 1], [], []>} : vector<128x256xbf16>, vector<256x256xbf16>, vector<128x256xf32> -> vector<128x256xf32>
    %c0_5 = arith.constant 0 : index
    %c0_6 = arith.constant 0 : index
    %24 = vector.load %arg3[%c0_5, %c0_6] : memref<1x256xf32, #tpu.memory_space<vmem>>, vector<1x256xf32>
    %25 = vector.broadcast %24 : vector<1x256xf32> to vector<128x256xf32>
    %26 = arith.addf %23, %25 : vector<128x256xf32>
    %cst_7 = arith.constant 0.000000e+00 : f32
    %27 = vector.broadcast %cst_7 : f32 to vector<128x256xf32>
    %28 = arith.maximumf %26, %27 : vector<128x256xf32>
    %29 = arith.truncf %28 : vector<128x256xf32> to vector<128x256xbf16>
    %c0_8 = arith.constant 0 : index
    %c0_9 = arith.constant 0 : index
    %30 = vector.load %arg4[%c0_8, %c0_9] : memref<256x128xbf16, #tpu.memory_space<vmem>>, vector<256x128xbf16>
    %cst_10 = arith.constant dense<0.000000e+00> : vector<128x128xf32>
    %31 = tpu.matmul %29, %30, %cst_10 {dimension_numbers = #tpu.dot_dimension_numbers<[1], [0], [0], [1], [0, 0, 1, 1], [], []>} : vector<128x256xbf16>, vector<256x128xbf16>, vector<128x128xf32> -> vector<128x128xf32>
    %c0_11 = arith.constant 0 : index
    %c0_12 = arith.constant 0 : index
    %32 = vector.load %arg5[%c0_11, %c0_12] : memref<1x128xf32, #tpu.memory_space<vmem>>, vector<1x128xf32>
    %33 = vector.broadcast %32 : vector<1x128xf32> to vector<128x128xf32>
    %34 = arith.addf %31, %33 : vector<128x128xf32>
    %cst_13 = arith.constant dense<0xFF800000> : vector<128xf32>
    %35 = vector.multi_reduction <maximumf>, %34, %cst_13 [1] : vector<128x128xf32> to vector<128xf32>
    %36 = vector.shape_cast %35 : vector<128xf32> to vector<128x1xf32>
    %37 = vector.broadcast %36 : vector<128x1xf32> to vector<128x128xf32>
    %38 = arith.subf %34, %37 : vector<128x128xf32>
    %39 = math.exp %38 : vector<128x128xf32>
    %cst_14 = arith.constant dense<0.000000e+00> : vector<128xf32>
    %40 = vector.multi_reduction <add>, %39, %cst_14 [1] : vector<128x128xf32> to vector<128xf32>
    %41 = vector.shape_cast %40 : vector<128xf32> to vector<128x1xf32>
    %42 = math.log %41 : vector<128x1xf32>
    %43 = vector.broadcast %42 : vector<128x1xf32> to vector<128x128xf32>
    %44 = arith.subf %38, %43 : vector<128x128xf32>
    %c0_15 = arith.constant 0 : index
    %c0_16 = arith.constant 0 : index
    %45 = vector.load %arg6[%c0_15, %c0_16] : memref<128x128xf32, #tpu.memory_space<vmem>>, vector<128x128xf32>
    tpu.vector_store %arg6[%c0_15, %c0_16], %44 {strides = array<i32>} : memref<128x128xf32, #tpu.memory_space<vmem>>, vector<128x128xf32>,
    return
  }
  func.func @transform_0(%arg0: i32) -> (i32, i32) {
    %c0_i32 = arith.constant 0 : i32
    %c0_i32_0 = arith.constant 0 : i32
    return %arg0, %c0_i32 : i32, i32
  }
  func.func @transform_1(%arg0: i32) -> (i32, i32) {
    %c0_i32 = arith.constant 0 : i32
    %c0_i32_0 = arith.constant 0 : i32
    %c0_i32_1 = arith.constant 0 : i32
    return %c0_i32, %c0_i32_0 : i32, i32
  }
  func.func @transform_2(%arg0: i32) -> (i32, i32) {
    %c0_i32 = arith.constant 0 : i32
    %c0_i32_0 = arith.constant 0 : i32
    %c0_i32_1 = arith.constant 0 : i32
    return %c0_i32, %c0_i32_0 : i32, i32
  }
  func.func @transform_3(%arg0: i32) -> (i32, i32) {
    %c0_i32 = arith.constant 0 : i32
    %c0_i32_0 = arith.constant 0 : i32
    %c0_i32_1 = arith.constant 0 : i32
    return %c0_i32, %c0_i32_0 : i32, i32
  }
  func.func @transform_4(%arg0: i32) -> (i32, i32) {
    %c0_i32 = arith.constant 0 : i32
    %c0_i32_0 = arith.constant 0 : i32
    %c0_i32_1 = arith.constant 0 : i32
    return %c0_i32, %c0_i32_0 : i32, i32
  }
  func.func @transform_5(%arg0: i32) -> (i32, i32) {
    %c0_i32 = arith.constant 0 : i32
    %c0_i32_0 = arith.constant 0 : i32
    return %arg0, %c0_i32 : i32, i32
  }
}

</mosaic_0001>

<llo_original>
// kernel: ngram_forward.1
$region0: #{ngram_forward.1}
  #allocation0 [shape = 'u32[]', space=smem, size = 0x4, offset = 0x4, fixed_abs, tag = 'smem constant byte address 0x4 - core index']
  #allocation1 [shape = 'u32[144,128]{1,0:T(1,128)}', space=vmem, size = 0x12000, scoped, tag = 'internal scratch']
  %s0 = inlined_call_operand.vmem [shape: s32[256,2], index: 0, kind: input, shape index: {}]
  %s1 = inlined_call_operand.vmem [shape: bf16[256,256], index: 1, kind: input, shape index: {}]
  %s2 = inlined_call_operand.vmem [shape: f32[1,256], index: 2, kind: input, shape index: {}]
  %s3 = inlined_call_operand.hbm [shape: bf16[256,128], index: 3, kind: input, shape index: {}]
  %s4 = inlined_call_operand.vmem [shape: f32[1,128], index: 4, kind: input, shape index: {}]
  %s5 = inlined_call_operand.hbm [shape: f32[256,128], index: 5, kind: output, shape index: {}]
  %s6 = sld [smem:[#allocation0]]
  $region57: #{ngram_forward.1} parent=0
    _
  %s8 = ssub.s32 1, %s6
  %s9 = scalar_select 0, %s8, %s6
  $region1: #{ngram_forward.1} parent=0
    #allocation2 [shape = 'u8[65536]{0}', space=vmem, size = 0x10000, scoped, tag = 'input window, operand 3, single buffered']
    #allocation3 [shape = 's32[2]{0}', space=sflag, size = 0x8, scoped, tag = 'scoped memory for ngram_forward.1']
    #allocation4 [shape = 's32[2]{0}', space=sflag, size = 0x8, scoped, tag = 'scoped memory for ngram_forward.1']
    #allocation5 [shape = 'u8[131072]{0}', space=vmem, size = 0x20000, scoped, tag = 'output window, operand 0']
    %10 = vsyncpa [#allocation3], 0
    %11 = vsyncpa [#allocation4], 0
    %s12 = scalar_lea.sflag [#allocation4], 1
    %13 = vsyncpa %s12, 0
    loop: start=0, step=1, limit=4
    $region2: #{ngram_forward.1} parent=1 // loop_pre_header
      _
    $region3: #{ngram_forward.1} parent=1 // loop_header
      %s15 = sphi 0, %s19
      %p16 = scmp.ge.s32.totalorder %s15, 4
      %s25 = sphi 0, %s27
      %s28 = sphi 0, %s25
      %s29 = sphi 0, %s28
      %s45 = sphi 0, %s29
      %s49 = sphi 0, %s49
      %s51 = sphi 0, %s49
      %s52 = sphi 0, %s51
      %s66 = sphi 0, %s52
      %s70 = sphi 0, %s70
      %s72 = sphi 0, %s70
      %s73 = sphi 0, %s72
      %s87 = sphi 0, %s73
      %s91 = sphi 0, %s91
      %s93 = sphi 0, %s91
      %s94 = sphi 0, %s93
      %s108 = sphi 0, %s94
      %s112 = sphi 0, %s112
      %s114 = sphi 0, %s112
      %s115 = sphi 0, %s114
      %s129 = sphi 0, %s115
      %s135 = sphi 0, %s137
      %s138 = sphi 0, %s135
      %s139 = sphi 0, %s138
      %s155 = sphi 0, %s139
    $region4: #{ngram_forward.1} parent=1 // loop_header_branch
      %18 = sbr.rel (%p16) target = $region8
    $region5: #{ngram_forward.1} parent=1 // loop_body
      %s20 = ssub.s32 %s15, 1
      %s21 = ssub.s32 %s15, 2
      %s22 = sadd.s32 %s15, 1
      %s23 = ssub.s32 %s15, %s22
      %p24 = scmp.eq.s32.totalorder %s23, 0
      %s26 = sadd.s32 %s25, 1
      %s27 = scalar_select %p24, %s25, %s26
      %p30 = pneg %p24
      %p31 = scmp.eq.s32.totalorder %s15, 1
      %p32 = por %p30, %p31
      %p33 = scmp.ne.s32.totalorder %s25, %s28
      %p34 = scmp.eq.s32.totalorder %s15, 0
      %p35 = por %p33, %p34
      %p36 = scmp.ne.s32.totalorder %s25, %s28
      %p37 = scmp.eq.s32.totalorder %s20, 1
      %p38 = por %p36, %p37
      %p39 = scmp.ne.s32.totalorder %s28, %s29
      %p40 = scmp.eq.s32.totalorder %s20, 0
      %p41 = por %p39, %p40
      %p42 = scmp.ne.s32.totalorder %s28, %s29
      %p43 = scmp.eq.s32.totalorder %s21, 1
      %p44 = por %p42, %p43
      %p46 = scmp.ne.s32.totalorder %s29, %s45
      %p47 = scmp.eq.s32.totalorder %s21, 0
      %p48 = por %p46, %p47
      %s50 = sadd.s32 %s49, 1
      %p53 = scmp.eq.s32.totalorder %s15, 1
      %p54 = scmp.ne.s32.totalorder %s49, %s51
      %p55 = scmp.eq.s32.totalorder %s15, 0
      %p56 = por %p54, %p55
      %p57 = scmp.ne.s32.totalorder %s49, %s51
      %p58 = scmp.eq.s32.totalorder %s20, 1
      %p59 = por %p57, %p58
      %p60 = scmp.ne.s32.totalorder %s51, %s52
      %p61 = scmp.eq.s32.totalorder %s20, 0
      %p62 = por %p60, %p61
      %p63 = scmp.ne.s32.totalorder %s51, %s52
      %p64 = scmp.eq.s32.totalorder %s21, 1
      %p65 = por %p63, %p64
      %p67 = scmp.ne.s32.totalorder %s52, %s66
      %p68 = scmp.eq.s32.totalorder %s21, 0
      %p69 = por %p67, %p68
      %s71 = sadd.s32 %s70, 1
      %p74 = scmp.eq.s32.totalorder %s15, 1
      %p75 = scmp.ne.s32.totalorder %s70, %s72
      %p76 = scmp.eq.s32.totalorder %s15, 0
      %p77 = por %p75, %p76
      %p78 = scmp.ne.s32.totalorder %s70, %s72
      %p79 = scmp.eq.s32.totalorder %s20, 1
      %p80 = por %p78, %p79
      %p81 = scmp.ne.s32.totalorder %s72, %s73
      %p82 = scmp.eq.s32.totalorder %s20, 0
      %p83 = por %p81, %p82
      %p84 = scmp.ne.s32.totalorder %s72, %s73
      %p85 = scmp.eq.s32.totalorder %s21, 1
      %p86 = por %p84, %p85
      %p88 = scmp.ne.s32.totalorder %s73, %s87
      %p89 = scmp.eq.s32.totalorder %s21, 0
      %p90 = por %p88, %p89
      %s92 = sadd.s32 %s91, 1
      %p95 = scmp.eq.s32.totalorder %s15, 1
      %p96 = scmp.ne.s32.totalorder %s91, %s93
      %p97 = scmp.eq.s32.totalorder %s15, 0
      %p98 = por %p96, %p97
      %p99 = scmp.ne.s32.totalorder %s91, %s93
      %p100 = scmp.eq.s32.totalorder %s20, 1
      %p101 = por %p99, %p100
      %p102 = scmp.ne.s32.totalorder %s93, %s94
      %p103 = scmp.eq.s32.totalorder %s20, 0
      %p104 = por %p102, %p103
      %p105 = scmp.ne.s32.totalorder %s93, %s94
      %p106 = scmp.eq.s32.totalorder %s21, 1
      %p107 = por %p105, %p106
      %p109 = scmp.ne.s32.totalorder %s94, %s108
      %p110 = scmp.eq.s32.totalorder %s21, 0
      %p111 = por %p109, %p110
      %s113 = sadd.s32 %s112, 1
      %p116 = scmp.eq.s32.totalorder %s15, 1
      %p117 = scmp.ne.s32.totalorder %s112, %s114
      %p118 = scmp.eq.s32.totalorder %s15, 0
      %p119 = por %p117, %p118
      %p120 = scmp.ne.s32.totalorder %s112, %s114
      %p121 = scmp.eq.s32.totalorder %s20, 1
      %p122 = por %p120, %p121
      %p123 = scmp.ne.s32.totalorder %s114, %s115
      %p124 = scmp.eq.s32.totalorder %s20, 0
      %p125 = por %p123, %p124
      %p126 = scmp.ne.s32.totalorder %s114, %s115
      %p127 = scmp.eq.s32.totalorder %s21, 1
      %p128 = por %p126, %p127
      %p130 = scmp.ne.s32.totalorder %s115, %s129
      %p131 = scmp.eq.s32.totalorder %s21, 0
      %p132 = por %p130, %p131
      %s133 = ssub.s32 %s15, %s22
      %p134 = scmp.eq.s32.totalorder %s133, 0
      %s136 = sadd.s32 %s135, 1
      %s137 = scalar_select %p134, %s135, %s136
      %p140 = pneg %p134
      %p141 = scmp.eq.s32.totalorder %s15, 1
      %p142 = por %p140, %p141
      %p143 = scmp.ne.s32.totalorder %s135, %s138
      %p144 = scmp.eq.s32.totalorder %s15, 0
      %p145 = por %p143, %p144
      %p146 = scmp.ne.s32.totalorder %s135, %s138
      %p147 = scmp.eq.s32.totalorder %s20, 1
      %p148 = por %p146, %p147
      %p149 = scmp.ne.s32.totalorder %s138, %s139
      %p150 = scmp.eq.s32.totalorder %s20, 0
      %p151 = por %p149, %p150
      %p152 = scmp.ne.s32.totalorder %s138, %s139
      %p153 = scmp.eq.s32.totalorder %s21, 1
      %p154 = por %p152, %p153
      %p156 = scmp.ne.s32.totalorder %s139, %s155
      %p157 = scmp.eq.s32.totalorder %s21, 0
      %p158 = por %p156, %p157
      %p159 = scmp.le.s32.totalorder 1, %s15
      %p160 = scmp.lt.s32.totalorder %s15, 3
      %p161 = pnand %p159, %p160
      %p162 = pneg %p161
      // Predicated region
      $region9: #{ngram_forward.1} parent=5 // pred_check
        _
      $region10: #{ngram_forward.1} parent=5 // pred_check_branch
        %164 = sbr.rel (%p161) target = $region12
      $region11: #{ngram_forward.1} parent=5 // pred_region
        %s165 = ssub.s32 %s15, 1
        // Predicated region
        $region13: #{ngram_forward.1} parent=11 // pred_check
          %p166 = pneg %p62
        $region14: #{ngram_forward.1} parent=11 // pred_check_branch
          %168 = sbr.rel (%p166) target = $region16
        $region15: #{ngram_forward.1} parent=11 // pred_region
          _
        $region16: #{ngram_forward.1} parent=11 // pred_fallthru
          _
        // Predicated region
        $region17: #{ngram_forward.1} parent=11 // pred_check
          %p169 = pneg %p83
        $region18: #{ngram_forward.1} parent=11 // pred_check_branch
          %171 = sbr.rel (%p169) target = $region20
        $region19: #{ngram_forward.1} parent=11 // pred_region
          _
        $region20: #{ngram_forward.1} parent=11 // pred_fallthru
          _
        // Predicated region
        $region21: #{ngram_forward.1} parent=11 // pred_check
          %p172 = pneg %p104
        $region22: #{ngram_forward.1} parent=11 // pred_check_branch
          %174 = sbr.rel (%p172) target = $region24
        $region23: #{ngram_forward.1} parent=11 // pred_region
          %s176 = ssub.s32 2048, 2048
          %177 = vsyncadd [#allocation3], %s176
          %s178 = sshll.u32 [#allocation2], 4
          %s179 = int_to_ptr.vmem [resolvable:$true] %s178
          %184 = dma.hbm_to_vmem [thread:$0]  %s3, 2048, %s179, [#allocation3], 64, 64, 4
        $region24: #{ngram_forward.1} parent=11 // pred_fallthru
          _
        // Predicated region
        $region25: #{ngram_forward.1} parent=11 // pred_check
          %p185 = pneg %p125
        $region26: #{ngram_forward.1} parent=11 // pred_check_branch
          %187 = sbr.rel (%p185) target = $region28
        $region27: #{ngram_forward.1} parent=11 // pred_region
          _
        $region28: #{ngram_forward.1} parent=11 // pred_fallthru
          _
      $region12: #{ngram_forward.1} parent=5 // pred_fallthru
        _
      %p188 = scmp.lt.s32.totalorder %s15, 2
      // Predicated region
      $region29: #{ngram_forward.1} parent=5 // pred_check
        %p189 = pneg %p188
      $region30: #{ngram_forward.1} parent=5 // pred_check_branch
        %191 = sbr.rel (%p189) target = $region32
      $region31: #{ngram_forward.1} parent=5 // pred_region
        // Predicated region
        $region33: #{ngram_forward.1} parent=31 // pred_check
          %p192 = pneg %p35
        $region34: #{ngram_forward.1} parent=31 // pred_check_branch
          %194 = sbr.rel (%p192) target = $region36
        $region35: #{ngram_forward.1} parent=31 // pred_region
          %s195 = smul.u32 16, %s15
          %p196 = scmp.lt.s32.totalorder %s195, 31
          %s197 = scalar_select %p196, %s195, 31
          %s198 = smul.addr %s197, 8
          %s199 = scalar_lea.vmem %s0, %s198
          %s200 = smul.u32 16, %s15
        $region36: #{ngram_forward.1} parent=31 // pred_fallthru
          _
      $region32: #{ngram_forward.1} parent=5 // pred_fallthru
        _
      %p201 = scmp.le.s32.totalorder 1, %s15
      %p202 = scmp.lt.s32.totalorder %s15, 3
      %p203 = pnand %p201, %p202
      %p204 = pneg %p203
      // Predicated region
      $region37: #{ngram_forward.1} parent=5 // pred_check
        _
      $region38: #{ngram_forward.1} parent=5 // pred_check_branch
        %206 = sbr.rel (%p203) target = $region40
      $region39: #{ngram_forward.1} parent=5 // pred_region
        %s207 = ssub.s32 %s15, 1
        // Predicated region
        $region41: #{ngram_forward.1} parent=39 // pred_check
          %p208 = pneg %p104
        $region42: #{ngram_forward.1} parent=39 // pred_check_branch
          %210 = sbr.rel (%p208) target = $region44
        $region43: #{ngram_forward.1} parent=39 // pred_region
          %211 = dma.done [#allocation3], 2048
        $region44: #{ngram_forward.1} parent=39 // pred_fallthru
          _
        %s212 = smul.u32 16, %s20
        %p213 = scmp.lt.s32.totalorder %s212, 31
        %s214 = scalar_select %p213, %s212, 31
        %s215 = smul.addr %s214, 8
        %s216 = scalar_lea.vmem %s0, %s215
        %p217 = pneg %p41
        %p218 = pneg %p38
        %p219 = pneg %p62
        %p220 = pneg %p59
        %p221 = pneg %p83
        %p222 = pneg %p80
        %p223 = pneg %p104
        %p224 = pneg %p101
        %p225 = pneg %p125
        %p226 = pneg %p122
        %p227 = pneg %p151
        %p228 = pneg %p148
        %s229 = sand.u32 %s138, 1
        %s230 = scalar_lea.sflag [#allocation4], %s229
        %s231 = sand.u32 %s138, 1
        %s232 = smul.addr %s231, 128
        %s233 = scalar_lea.vmem [#allocation5], %s232
        %s234 = smul.u32 16, %s20
        %p235 = scmp.lt.s32.totalorder %s234, 31
        %s236 = scalar_select %p235, %s234, 31
        %s237 = smul.addr %s236, 8
        %s238 = scalar_lea.vmem %s0, %s237
        %s239 = smul.u32 16, %s20
        %s240 = smul.u32 16, %s20
        %v242 = vlaneseq
        %v243 = vand.u32 %v242, 127
        %v244 = vadd.s32 %v243, 128
        %v245 = vld [vmem:[%s238] sm:$0xff]
        %v246 = vld [vmem:[%s238 + $0x8] sm:$0xff]
        %v247 = vld [vmem:[%s238 + $0x10] sm:$0xff]
        %v248 = vld [vmem:[%s238 + $0x18] sm:$0xff]
        %v249 = vld [vmem:[%s238 + $0x20] sm:$0xff]
        %v250 = vld [vmem:[%s238 + $0x28] sm:$0xff]
        %v251 = vld [vmem:[%s238 + $0x30] sm:$0xff]
        %v252 = vld [vmem:[%s238 + $0x38] sm:$0xff]
        %v253 = vld [vmem:[%s238 + $0x40] sm:$0xff]
        %v254 = vld [vmem:[%s238 + $0x48] sm:$0xff]
        %v255 = vld [vmem:[%s238 + $0x50] sm:$0xff]
        %v256 = vld [vmem:[%s238 + $0x58] sm:$0xff]
        %v257 = vld [vmem:[%s238 + $0x60] sm:$0xff]
        %v258 = vld [vmem:[%s238 + $0x68] sm:$0xff]
        %v259 = vld [vmem:[%s238 + $0x70] sm:$0xff]
        %v260 = vld [vmem:[%s238 + $0x78] sm:$0xff]
        %261 = vset.pattern.permute.xlu0 0
        %262 = vperm.xlu0 %261, %v245
        %v263 = vpop.permute.xlu0 %262
        %264 = vset.pattern.permute.xlu0 0
        %265 = vperm.xlu0 %264, %v246
        %v266 = vpop.permute.xlu0 %265
        %267 = vset.pattern.permute.xlu0 0
        %268 = vperm.xlu0 %267, %v247
        %v269 = vpop.permute.xlu0 %268
        %270 = vset.pattern.permute.xlu0 0
        %271 = vperm.xlu0 %270, %v248
        %v272 = vpop.permute.xlu0 %271
        %273 = vset.pattern.permute.xlu0 0
        %274 = vperm.xlu0 %273, %v249
        %v275 = vpop.permute.xlu0 %274
        %276 = vset.pattern.permute.xlu0 0
        %277 = vperm.xlu0 %276, %v250
        %v278 = vpop.permute.xlu0 %277
        %279 = vset.pattern.permute.xlu0 0
        %280 = vperm.xlu0 %279, %v251
        %v281 = vpop.permute.xlu0 %280
        %282 = vset.pattern.permute.xlu0 0
        %283 = vperm.xlu0 %282, %v252
        %v284 = vpop.permute.xlu0 %283
        %285 = vset.pattern.permute.xlu0 0
        %286 = vperm.xlu0 %285, %v253
        %v287 = vpop.permute.xlu0 %286
        %288 = vset.pattern.permute.xlu0 0
        %289 = vperm.xlu0 %288, %v254
        %v290 = vpop.permute.xlu0 %289
        %291 = vset.pattern.permute.xlu0 0
        %292 = vperm.xlu0 %291, %v255
        %v293 = vpop.permute.xlu0 %292
        %294 = vset.pattern.permute.xlu0 0
        %295 = vperm.xlu0 %294, %v256
        %v296 = vpop.permute.xlu0 %295
        %297 = vset.pattern.permute.xlu0 0
        %298 = vperm.xlu0 %297, %v257
        %v299 = vpop.permute.xlu0 %298
        %300 = vset.pattern.permute.xlu0 0
        %301 = vperm.xlu0 %300, %v258
        %v302 = vpop.permute.xlu0 %301
        %303 = vset.pattern.permute.xlu0 0
        %304 = vperm.xlu0 %303, %v259
        %v305 = vpop.permute.xlu0 %304
        %306 = vset.pattern.permute.xlu0 0
        %307 = vperm.xlu0 %306, %v260
        %v308 = vpop.permute.xlu0 %307
        %vm309 = vcmp.eq.s32.totalorder %v263, %v243
        %vm310 = vcmp.eq.s32.totalorder %v263, %v244
        %vm311 = vcmp.eq.s32.totalorder %v266, %v243
        %vm312 = vcmp.eq.s32.totalorder %v266, %v244
        %vm313 = vcmp.eq.s32.totalorder %v269, %v243
        %vm314 = vcmp.eq.s32.totalorder %v269, %v244
        %vm315 = vcmp.eq.s32.totalorder %v272, %v243
        %vm316 = vcmp.eq.s32.totalorder %v272, %v244
        %vm317 = vcmp.eq.s32.totalorder %v275, %v243
        %vm318 = vcmp.eq.s32.totalorder %v275, %v244
        %vm319 = vcmp.eq.s32.totalorder %v278, %v243
        %vm320 = vcmp.eq.s32.totalorder %v278, %v244
        %vm321 = vcmp.eq.s32.totalorder %v281, %v243
        %vm322 = vcmp.eq.s32.totalorder %v281, %v244
        %vm323 = vcmp.eq.s32.totalorder %v284, %v243
        %vm324 = vcmp.eq.s32.totalorder %v284, %v244
        %vm325 = vcmp.eq.s32.totalorder %v287, %v243
        %vm326 = vcmp.eq.s32.totalorder %v287, %v244
        %vm327 = vcmp.eq.s32.totalorder %v290, %v243
        %vm328 = vcmp.eq.s32.totalorder %v290, %v244
        %vm329 = vcmp.eq.s32.totalorder %v293, %v243
        %vm330 = vcmp.eq.s32.totalorder %v293, %v244
        %vm331 = vcmp.eq.s32.totalorder %v296, %v243
        %vm332 = vcmp.eq.s32.totalorder %v296, %v244
        %vm333 = vcmp.eq.s32.totalorder %v299, %v243
        %vm334 = vcmp.eq.s32.totalorder %v299, %v244
        %vm335 = vcmp.eq.s32.totalorder %v302, %v243
        %vm336 = vcmp.eq.s32.totalorder %v302, %v244
        %vm337 = vcmp.eq.s32.totalorder %v305, %v243
        %vm338 = vcmp.eq.s32.totalorder %v305, %v244
        %vm339 = vcmp.eq.s32.totalorder %v308, %v243
        %vm340 = vcmp.eq.s32.totalorder %v308, %v244
        %v341 = vsel %vm309, 1, 0
        %v342 = vsel %vm310, 1, 0
        %v343 = vsel %vm311, 1, 0
        %v344 = vsel %vm312, 1, 0
        %v345 = vsel %vm313, 1, 0
        %v346 = vsel %vm314, 1, 0
        %v347 = vsel %vm315, 1, 0
        %v348 = vsel %vm316, 1, 0
        %v349 = vsel %vm317, 1, 0
        %v350 = vsel %vm318, 1, 0
        %v351 = vsel %vm319, 1, 0
        %v352 = vsel %vm320, 1, 0
        %v353 = vsel %vm321, 1, 0
        %v354 = vsel %vm322, 1, 0
        %v355 = vsel %vm323, 1, 0
        %v356 = vsel %vm324, 1, 0
        %v357 = vsel %vm325, 1, 0
        %v358 = vsel %vm326, 1, 0
        %v359 = vsel %vm327, 1, 0
        %v360 = vsel %vm328, 1, 0
        %v361 = vsel %vm329, 1, 0
        %v362 = vsel %vm330, 1, 0
        %v363 = vsel %vm331, 1, 0
        %v364 = vsel %vm332, 1, 0
        %v365 = vsel %vm333, 1, 0
        %v366 = vsel %vm334, 1, 0
        %v367 = vsel %vm335, 1, 0
        %v368 = vsel %vm336, 1, 0
        %v369 = vsel %vm337, 1, 0
        %v370 = vsel %vm338, 1, 0
        %v371 = vsel %vm339, 1, 0
        %v372 = vsel %vm340, 1, 0
        %v373 = vcvt.s32.f32 %v341
        %v374 = vcvt.s32.f32 %v342
        %v375 = vcvt.s32.f32 %v343
        %v376 = vcvt.s32.f32 %v344
        %v377 = vcvt.s32.f32 %v345
        %v378 = vcvt.s32.f32 %v346
        %v379 = vcvt.s32.f32 %v347
        %v380 = vcvt.s32.f32 %v348
        %v381 = vcvt.s32.f32 %v349
        %v382 = vcvt.s32.f32 %v350
        %v383 = vcvt.s32.f32 %v351
        %v384 = vcvt.s32.f32 %v352
        %v385 = vcvt.s32.f32 %v353
        %v386 = vcvt.s32.f32 %v354
        %v387 = vcvt.s32.f32 %v355
        %v388 = vcvt.s32.f32 %v356
        %v389 = vcvt.s32.f32 %v357
        %v390 = vcvt.s32.f32 %v358
        %v391 = vcvt.s32.f32 %v359
        %v392 = vcvt.s32.f32 %v360
        %v393 = vcvt.s32.f32 %v361
        %v394 = vcvt.s32.f32 %v362
        %v395 = vcvt.s32.f32 %v363
        %v396 = vcvt.s32.f32 %v364
        %v397 = vcvt.s32.f32 %v365
        %v398 = vcvt.s32.f32 %v366
        %v399 = vcvt.s32.f32 %v367
        %v400 = vcvt.s32.f32 %v368
        %v401 = vcvt.s32.f32 %v369
        %v402 = vcvt.s32.f32 %v370
        %v403 = vcvt.s32.f32 %v371
        %v404 = vcvt.s32.f32 %v372
        %v405 = vpack.c.bf16 %v375, %v373
        %v406 = vpack.c.bf16 %v376, %v374
        %v407 = vpack.c.bf16 %v379, %v377
        %v408 = vpack.c.bf16 %v380, %v378
        %v409 = vpack.c.bf16 %v383, %v381
        %v410 = vpack.c.bf16 %v384, %v382
        %v411 = vpack.c.bf16 %v387, %v385
        %v412 = vpack.c.bf16 %v388, %v386
        %v413 = vpack.c.bf16 %v391, %v389
        %v414 = vpack.c.bf16 %v392, %v390
        %v415 = vpack.c.bf16 %v395, %v393
        %v416 = vpack.c.bf16 %v396, %v394
        %v417 = vpack.c.bf16 %v399, %v397
        %v418 = vpack.c.bf16 %v400, %v398
        %v419 = vpack.c.bf16 %v403, %v401
        %v420 = vpack.c.bf16 %v404, %v402
        %v421 = vadd.bf16 %v405, 0
        %v422 = vadd.bf16 %v406, 0
        %v423 = vadd.bf16 %v407, 0
        %v424 = vadd.bf16 %v408, 0
        %v425 = vadd.bf16 %v409, 0
        %v426 = vadd.bf16 %v410, 0
        %v427 = vadd.bf16 %v411, 0
        %v428 = vadd.bf16 %v412, 0
        %v429 = vadd.bf16 %v413, 0
        %v430 = vadd.bf16 %v414, 0
        %v431 = vadd.bf16 %v415, 0
        %v432 = vadd.bf16 %v416, 0
        %v433 = vadd.bf16 %v417, 0
        %v434 = vadd.bf16 %v418, 0
        %v435 = vadd.bf16 %v419, 0
        %v436 = vadd.bf16 %v420, 0
        %v437 = vadd.s32 %v245, 128
        %v438 = vadd.s32 %v246, 128
        %v439 = vadd.s32 %v247, 128
        %v440 = vadd.s32 %v248, 128
        %v441 = vadd.s32 %v249, 128
        %v442 = vadd.s32 %v250, 128
        %v443 = vadd.s32 %v251, 128
        %v444 = vadd.s32 %v252, 128
        %v445 = vadd.s32 %v253, 128
        %v446 = vadd.s32 %v254, 128
        %v447 = vadd.s32 %v255, 128
        %v448 = vadd.s32 %v256, 128
        %v449 = vadd.s32 %v257, 128
        %v450 = vadd.s32 %v258, 128
        %v451 = vadd.s32 %v259, 128
        %v452 = vadd.s32 %v260, 128
        %453 = vset.pattern.permute.xlu0 1
        %454 = vperm.xlu0 %453, %v437
        %v455 = vpop.permute.xlu0 %454
        %456 = vset.pattern.permute.xlu0 1
        %457 = vperm.xlu0 %456, %v438
        %v458 = vpop.permute.xlu0 %457
        %459 = vset.pattern.permute.xlu0 1
        %460 = vperm.xlu0 %459, %v439
        %v461 = vpop.permute.xlu0 %460
        %462 = vset.pattern.permute.xlu0 1
        %463 = vperm.xlu0 %462, %v440
        %v464 = vpop.permute.xlu0 %463
        %465 = vset.pattern.permute.xlu0 1
        %466 = vperm.xlu0 %465, %v441
        %v467 = vpop.permute.xlu0 %466
        %468 = vset.pattern.permute.xlu0 1
        %469 = vperm.xlu0 %468, %v442
        %v470 = vpop.permute.xlu0 %469
        %471 = vset.pattern.permute.xlu0 1
        %472 = vperm.xlu0 %471, %v443
        %v473 = vpop.permute.xlu0 %472
        %474 = vset.pattern.permute.xlu0 1
        %475 = vperm.xlu0 %474, %v444
        %v476 = vpop.permute.xlu0 %475
        %477 = vset.pattern.permute.xlu0 1
        %478 = vperm.xlu0 %477, %v445
        %v479 = vpop.permute.xlu0 %478
        %480 = vset.pattern.permute.xlu0 1
        %481 = vperm.xlu0 %480, %v446
        %v482 = vpop.permute.xlu0 %481
        %483 = vset.pattern.permute.xlu0 1
        %484 = vperm.xlu0 %483, %v447
        %v485 = vpop.permute.xlu0 %484
        %486 = vset.pattern.permute.xlu0 1
        %487 = vperm.xlu0 %486, %v448
        %v488 = vpop.permute.xlu0 %487
        %489 = vset.pattern.permute.xlu0 1
        %490 = vperm.xlu0 %489, %v449
        %v491 = vpop.permute.xlu0 %490
        %492 = vset.pattern.permute.xlu0 1
        %493 = vperm.xlu0 %492, %v450
        %v494 = vpop.permute.xlu0 %493
        %495 = vset.pattern.permute.xlu0 1
        %496 = vperm.xlu0 %495, %v451
        %v497 = vpop.permute.xlu0 %496
        %498 = vset.pattern.permute.xlu0 1
        %499 = vperm.xlu0 %498, %v452
        %v500 = vpop.permute.xlu0 %499
        %vm501 = vcmp.eq.s32.totalorder %v455, %v243
        %vm502 = vcmp.eq.s32.totalorder %v455, %v244
        %vm503 = vcmp.eq.s32.totalorder %v458, %v243
        %vm504 = vcmp.eq.s32.totalorder %v458, %v244
        %vm505 = vcmp.eq.s32.totalorder %v461, %v243
        %vm506 = vcmp.eq.s32.totalorder %v461, %v244
        %vm507 = vcmp.eq.s32.totalorder %v464, %v243
        %vm508 = vcmp.eq.s32.totalorder %v464, %v244
        %vm509 = vcmp.eq.s32.totalorder %v467, %v243
        %vm510 = vcmp.eq.s32.totalorder %v467, %v244
        %vm511 = vcmp.eq.s32.totalorder %v470, %v243
        %vm512 = vcmp.eq.s32.totalorder %v470, %v244
        %vm513 = vcmp.eq.s32.totalorder %v473, %v243
        %vm514 = vcmp.eq.s32.totalorder %v473, %v244
        %vm515 = vcmp.eq.s32.totalorder %v476, %v243
        %vm516 = vcmp.eq.s32.totalorder %v476, %v244
        %vm517 = vcmp.eq.s32.totalorder %v479, %v243
        %vm518 = vcmp.eq.s32.totalorder %v479, %v244
        %vm519 = vcmp.eq.s32.totalorder %v482, %v243
        %vm520 = vcmp.eq.s32.totalorder %v482, %v244
        %vm521 = vcmp.eq.s32.totalorder %v485, %v243
        %vm522 = vcmp.eq.s32.totalorder %v485, %v244
        %vm523 = vcmp.eq.s32.totalorder %v488, %v243
        %vm524 = vcmp.eq.s32.totalorder %v488, %v244
        %vm525 = vcmp.eq.s32.totalorder %v491, %v243
        %vm526 = vcmp.eq.s32.totalorder %v491, %v244
        %vm527 = vcmp.eq.s32.totalorder %v494, %v243
        %vm528 = vcmp.eq.s32.totalorder %v494, %v244
        %vm529 = vcmp.eq.s32.totalorder %v497, %v243
        %vm530 = vcmp.eq.s32.totalorder %v497, %v244
        %vm531 = vcmp.eq.s32.totalorder %v500, %v243
        %vm532 = vcmp.eq.s32.totalorder %v500, %v244
        %v533 = vsel %vm501, 1, 0
        %v534 = vsel %vm502, 1, 0
        %v535 = vsel %vm503, 1, 0
        %v536 = vsel %vm504, 1, 0
        %v537 = vsel %vm505, 1, 0
        %v538 = vsel %vm506, 1, 0
        %v539 = vsel %vm507, 1, 0
        %v540 = vsel %vm508, 1, 0
        %v541 = vsel %vm509, 1, 0
        %v542 = vsel %vm510, 1, 0
        %v543 = vsel %vm511, 1, 0
        %v544 = vsel %vm512, 1, 0
        %v545 = vsel %vm513, 1, 0
        %v546 = vsel %vm514, 1, 0
        %v547 = vsel %vm515, 1, 0
        %v548 = vsel %vm516, 1, 0
        %v549 = vsel %vm517, 1, 0
        %v550 = vsel %vm518, 1, 0
        %v551 = vsel %vm519, 1, 0
        %v552 = vsel %vm520, 1, 0
        %v553 = vsel %vm521, 1, 0
        %v554 = vsel %vm522, 1, 0
        %v555 = vsel %vm523, 1, 0
        %v556 = vsel %vm524, 1, 0
        %v557 = vsel %vm525, 1, 0
        %v558 = vsel %vm526, 1, 0
        %v559 = vsel %vm527, 1, 0
        %v560 = vsel %vm528, 1, 0
        %v561 = vsel %vm529, 1, 0
        %v562 = vsel %vm530, 1, 0
        %v563 = vsel %vm531, 1, 0
        %v564 = vsel %vm532, 1, 0
        %v565 = vcvt.s32.f32 %v533
        %v566 = vcvt.s32.f32 %v534
        %v567 = vcvt.s32.f32 %v535
        %v568 = vcvt.s32.f32 %v536
        %v569 = vcvt.s32.f32 %v537
        %v570 = vcvt.s32.f32 %v538
        %v571 = vcvt.s32.f32 %v539
        %v572 = vcvt.s32.f32 %v540
        %v573 = vcvt.s32.f32 %v541
        %v574 = vcvt.s32.f32 %v542
        %v575 = vcvt.s32.f32 %v543
        %v576 = vcvt.s32.f32 %v544
        %v577 = vcvt.s32.f32 %v545
        %v578 = vcvt.s32.f32 %v546
        %v579 = vcvt.s32.f32 %v547
        %v580 = vcvt.s32.f32 %v548
        %v581 = vcvt.s32.f32 %v549
        %v582 = vcvt.s32.f32 %v550
        %v583 = vcvt.s32.f32 %v551
        %v584 = vcvt.s32.f32 %v552
        %v585 = vcvt.s32.f32 %v553
        %v586 = vcvt.s32.f32 %v554
        %v587 = vcvt.s32.f32 %v555
        %v588 = vcvt.s32.f32 %v556
        %v589 = vcvt.s32.f32 %v557
        %v590 = vcvt.s32.f32 %v558
        %v591 = vcvt.s32.f32 %v559
        %v592 = vcvt.s32.f32 %v560
        %v593 = vcvt.s32.f32 %v561
        %v594 = vcvt.s32.f32 %v562
        %v595 = vcvt.s32.f32 %v563
        %v596 = vcvt.s32.f32 %v564
        %v597 = vpack.c.bf16 %v567, %v565
        %v598 = vpack.c.bf16 %v568, %v566
        %v599 = vpack.c.bf16 %v571, %v569
        %v600 = vpack.c.bf16 %v572, %v570
        %v601 = vpack.c.bf16 %v575, %v573
        %v602 = vpack.c.bf16 %v576, %v574
        %v603 = vpack.c.bf16 %v579, %v577
        %v604 = vpack.c.bf16 %v580, %v578
        %v605 = vpack.c.bf16 %v583, %v581
        %v606 = vpack.c.bf16 %v584, %v582
        %v607 = vpack.c.bf16 %v587, %v585
        %v608 = vpack.c.bf16 %v588, %v586
        %v609 = vpack.c.bf16 %v591, %v589
        %v610 = vpack.c.bf16 %v592, %v590
        %v611 = vpack.c.bf16 %v595, %v593
        %v612 = vpack.c.bf16 %v596, %v594
        %v613 = vadd.bf16 %v421, %v597
        %v614 = vadd.bf16 %v422, %v598
        %v615 = vadd.bf16 %v423, %v599
        %v616 = vadd.bf16 %v424, %v600
        %v617 = vadd.bf16 %v425, %v601
        %v618 = vadd.bf16 %v426, %v602
        %v619 = vadd.bf16 %v427, %v603
        %v620 = vadd.bf16 %v428, %v604
        %v621 = vadd.bf16 %v429, %v605
        %v622 = vadd.bf16 %v430, %v606
        %v623 = vadd.bf16 %v431, %v607
        %v624 = vadd.bf16 %v432, %v608
        %v625 = vadd.bf16 %v433, %v609
        %v626 = vadd.bf16 %v434, %v610
        %v627 = vadd.bf16 %v435, %v611
        %v628 = vadd.bf16 %v436, %v612
        %v629 = vld [vmem:[%s1] sm:$0xff]
        %v630 = vld [vmem:[%s1 + $0x8] sm:$0xff]
        %v631 = vld [vmem:[%s1 + $0x10] sm:$0xff]
        %v632 = vld [vmem:[%s1 + $0x18] sm:$0xff]
        %v633 = vld [vmem:[%s1 + $0x20] sm:$0xff]
        %v634 = vld [vmem:[%s1 + $0x28] sm:$0xff]
        %v635 = vld [vmem:[%s1 + $0x30] sm:$0xff]
        %v636 = vld [vmem:[%s1 + $0x38] sm:$0xff]
        %v637 = vld [vmem:[%s1 + $0x40] sm:$0xff]
        %v638 = vld [vmem:[%s1 + $0x48] sm:$0xff]
        %v639 = vld [vmem:[%s1 + $0x50] sm:$0xff]
        %v640 = vld [vmem:[%s1 + $0x58] sm:$0xff]
        %v641 = vld [vmem:[%s1 + $0x60] sm:$0xff]
        %v642 = vld [vmem:[%s1 + $0x68] sm:$0xff]
        %v643 = vld [vmem:[%s1 + $0x70] sm:$0xff]
        %v644 = vld [vmem:[%s1 + $0x78] sm:$0xff]
        %v645 = vld [vmem:[%s1 + $0x80] sm:$0xff]
        %v646 = vld [vmem:[%s1 + $0x88] sm:$0xff]
        %v647 = vld [vmem:[%s1 + $0x90] sm:$0xff]
        %v648 = vld [vmem:[%s1 + $0x98] sm:$0xff]
        %v649 = vld [vmem:[%s1 + $0xa0] sm:$0xff]
        %v650 = vld [vmem:[%s1 + $0xa8] sm:$0xff]
        %v651 = vld [vmem:[%s1 + $0xb0] sm:$0xff]
        %v652 = vld [vmem:[%s1 + $0xb8] sm:$0xff]
        %v653 = vld [vmem:[%s1 + $0xc0] sm:$0xff]
        %v654 = vld [vmem:[%s1 + $0xc8] sm:$0xff]
        %v655 = vld [vmem:[%s1 + $0xd0] sm:$0xff]
        %v656 = vld [vmem:[%s1 + $0xd8] sm:$0xff]
        %v657 = vld [vmem:[%s1 + $0xe0] sm:$0xff]
        %v658 = vld [vmem:[%s1 + $0xe8] sm:$0xff]
        %v659 = vld [vmem:[%s1 + $0xf0] sm:$0xff]
        %v660 = vld [vmem:[%s1 + $0xf8] sm:$0xff]
        %v661 = vld [vmem:[%s2] sm:$0x3]
        %v663 = vlaneseq
        %v664 = vshrl.u32 %v663, 7
        %v665 = vsub.s32 0, %v664
        %v666 = vrot.slane %v661, %v665
        %v667 = vlaneseq
        %v668 = vshrl.u32 %v667, 7
        %v669 = vsub.s32 1, %v668
        %v670 = vrot.slane %v661, %v669
        %v705 = vunpack.c.l.b16 %v629
        %v706 = vunpack.c.h.b16 %v629
        %v707 = vunpack.c.l.b16 %v630
        %v708 = vunpack.c.h.b16 %v630
        %v709 = vunpack.c.l.b16 %v631
        %v710 = vunpack.c.h.b16 %v631
        %v711 = vunpack.c.l.b16 %v632
        %v712 = vunpack.c.h.b16 %v632
        %v713 = vunpack.c.l.b16 %v633
        %v714 = vunpack.c.h.b16 %v633
        %v715 = vunpack.c.l.b16 %v634
        %v716 = vunpack.c.h.b16 %v634
        %v717 = vunpack.c.l.b16 %v635
        %v718 = vunpack.c.h.b16 %v635
        %v719 = vunpack.c.l.b16 %v636
        %v720 = vunpack.c.h.b16 %v636
        %v721 = vunpack.c.l.b16 %v637
        %v722 = vunpack.c.h.b16 %v637
        %v723 = vunpack.c.l.b16 %v638
        %v724 = vunpack.c.h.b16 %v638
        %v725 = vunpack.c.l.b16 %v639
        %v726 = vunpack.c.h.b16 %v639
        %v727 = vunpack.c.l.b16 %v640
        %v728 = vunpack.c.h.b16 %v640
        %v729 = vunpack.c.l.b16 %v641
        %v730 = vunpack.c.h.b16 %v641
        %v731 = vunpack.c.l.b16 %v642
        %v732 = vunpack.c.h.b16 %v642
        %v733 = vunpack.c.l.b16 %v643
        %v734 = vunpack.c.h.b16 %v643
        %v735 = vunpack.c.l.b16 %v644
        %v736 = vunpack.c.h.b16 %v644
        %v737 = vunpack.c.l.b16 %v645
        %v738 = vunpack.c.h.b16 %v645
        %v739 = vunpack.c.l.b16 %v646
        %v740 = vunpack.c.h.b16 %v646
        %v741 = vunpack.c.l.b16 %v647
        %v742 = vunpack.c.h.b16 %v647
        %v743 = vunpack.c.l.b16 %v648
        %v744 = vunpack.c.h.b16 %v648
        %v745 = vunpack.c.l.b16 %v649
        %v746 = vunpack.c.h.b16 %v649
        %v747 = vunpack.c.l.b16 %v650
        %v748 = vunpack.c.h.b16 %v650
        %v749 = vunpack.c.l.b16 %v651
        %v750 = vunpack.c.h.b16 %v651
        %v751 = vunpack.c.l.b16 %v652
        %v752 = vunpack.c.h.b16 %v652
        %v753 = vunpack.c.l.b16 %v653
        %v754 = vunpack.c.h.b16 %v653
        %v755 = vunpack.c.l.b16 %v654
        %v756 = vunpack.c.h.b16 %v654
        %v757 = vunpack.c.l.b16 %v655
        %v758 = vunpack.c.h.b16 %v655
        %v759 = vunpack.c.l.b16 %v656
        %v760 = vunpack.c.h.b16 %v656
        %v761 = vunpack.c.l.b16 %v657
        %v762 = vunpack.c.h.b16 %v657
        %v763 = vunpack.c.l.b16 %v658
        %v764 = vunpack.c.h.b16 %v658
        %v765 = vunpack.c.l.b16 %v659
        %v766 = vunpack.c.h.b16 %v659
        %v767 = vunpack.c.l.b16 %v660
        %v768 = vunpack.c.h.b16 %v660
        %v769 = vpack.c.b16 %v707, %v705
        %v770 = vpack.c.b16 %v708, %v706
        %v771 = vpack.c.b16 %v711, %v709
        %v772 = vpack.c.b16 %v712, %v710
        %v773 = vpack.c.b16 %v715, %v713
        %v774 = vpack.c.b16 %v716, %v714
        %v775 = vpack.c.b16 %v719, %v717
        %v776 = vpack.c.b16 %v720, %v718
        %v777 = vpack.c.b16 %v723, %v721
        %v778 = vpack.c.b16 %v724, %v722
        %v779 = vpack.c.b16 %v727, %v725
        %v780 = vpack.c.b16 %v728, %v726
        %v781 = vpack.c.b16 %v731, %v729
        %v782 = vpack.c.b16 %v732, %v730
        %v783 = vpack.c.b16 %v735, %v733
        %v784 = vpack.c.b16 %v736, %v734
        %v785 = vpack.c.b16 %v739, %v737
        %v786 = vpack.c.b16 %v740, %v738
        %v787 = vpack.c.b16 %v743, %v741
        %v788 = vpack.c.b16 %v744, %v742
        %v789 = vpack.c.b16 %v747, %v745
        %v790 = vpack.c.b16 %v748, %v746
        %v791 = vpack.c.b16 %v751, %v749
        %v792 = vpack.c.b16 %v752, %v750
        %v793 = vpack.c.b16 %v755, %v753
        %v794 = vpack.c.b16 %v756, %v754
        %v795 = vpack.c.b16 %v759, %v757
        %v796 = vpack.c.b16 %v760, %v758
        %v797 = vpack.c.b16 %v763, %v761
        %v798 = vpack.c.b16 %v764, %v762
        %v799 = vpack.c.b16 %v767, %v765
        %v800 = vpack.c.b16 %v768, %v766
        %833 = vmatprep.subr.bf16.mxu0 %v784
        %834 = vmatpush1.bf16.msra.mxu0 %v783
        %835 = vmatprep.subr.bf16.mxu0 %v782
        %836 = vmatpush1.bf16.msra.mxu0 %v781
        %837 = vmatprep.subr.bf16.mxu0 %v780
        %838 = vmatpush1.bf16.msra.mxu0 %v779
        %839 = vmatprep.subr.bf16.mxu0 %v778
        %840 = vmatpush1.bf16.msra.mxu0 %v777
        %841 = vmatprep.subr.bf16.mxu0 %v776
        %842 = vmatpush1.bf16.msra.mxu0 %v775
        %843 = vmatprep.subr.bf16.mxu0 %v774
        %844 = vmatpush1.bf16.msra.mxu0 %v773
        %845 = vmatprep.subr.bf16.mxu0 %v772
        %846 = vmatpush1.bf16.msra.mxu0 %v771
        %847 = vmatprep.subr.bf16.mxu0 %v770
        %848 = vmatpush1.bf16.msra.mxu0 %v769
        %849 = vmatprep.subr.bf16.mxu0 %v800
        %850 = vmatpush2.bf16.msra.mxu0 %v799
        %851 = vmatprep.subr.bf16.mxu0 %v798
        %852 = vmatpush2.bf16.msra.mxu0 %v797
        %853 = vmatprep.subr.bf16.mxu0 %v796
        %854 = vmatpush2.bf16.msra.mxu0 %v795
        %855 = vmatprep.subr.bf16.mxu0 %v794
        %856 = vmatpush2.bf16.msra.mxu0 %v793
        %857 = vmatprep.subr.bf16.mxu0 %v792
        %858 = vmatpush2.bf16.msra.mxu0 %v791
        %859 = vmatprep.subr.bf16.mxu0 %v790
        %860 = vmatpush2.bf16.msra.mxu0 %v789
        %861 = vmatprep.subr.bf16.mxu0 %v788
        %862 = vmatpush2.bf16.msra.mxu0 %v787
        %863 = vmatprep.subr.bf16.mxu0 %v786
        %864 = vmatpush2.bf16.msra.mxu0 %v785
        %865 = vmatprep.mubr.bf16.mxu0 %v614
        %866 = vmatmul.mubr.bf16.gmra.mxu0 %v613
        %v867 = vpop.f32.mrf.mxu0
        %v868 = vadd.f32 %v666, %v867
        %v869 = vpop.f32.mrf.mxu0
        %v870 = vadd.f32 %v670, %v869
        %v871 = vpop.f32.mrf.mxu0
        %v872 = vadd.f32 %v666, %v871
        %v873 = vpop.f32.mrf.mxu0
        %v874 = vadd.f32 %v670, %v873
        %875 = vmatprep.mubr.bf16.mxu0 %v616
        %876 = vmatmul.mubr.bf16.gmra.mxu0 %v615
        %v877 = vpop.f32.mrf.mxu0
        %v878 = vadd.f32 %v666, %v877
        %v879 = vpop.f32.mrf.mxu0
        %v880 = vadd.f32 %v670, %v879
        %v881 = vpop.f32.mrf.mxu0
        %v882 = vadd.f32 %v666, %v881
        %v883 = vpop.f32.mrf.mxu0
        %v884 = vadd.f32 %v670, %v883
        %885 = vmatprep.mubr.bf16.mxu0 %v618
        %886 = vmatmul.mubr.bf16.gmra.mxu0 %v617
        %v887 = vpop.f32.mrf.mxu0
        %v888 = vadd.f32 %v666, %v887
        %v889 = vpop.f32.mrf.mxu0
        %v890 = vadd.f32 %v670, %v889
        %v891 = vpop.f32.mrf.mxu0
        %v892 = vadd.f32 %v666, %v891
        %v893 = vpop.f32.mrf.mxu0
        %v894 = vadd.f32 %v670, %v893
        %895 = vmatprep.mubr.bf16.mxu0 %v620
        %896 = vmatmul.mubr.bf16.gmra.mxu0 %v619
        %v897 = vpop.f32.mrf.mxu0
        %v898 = vadd.f32 %v666, %v897
        %v899 = vpop.f32.mrf.mxu0
        %v900 = vadd.f32 %v670, %v899
        %v901 = vpop.f32.mrf.mxu0
        %v902 = vadd.f32 %v666, %v901
        %v903 = vpop.f32.mrf.mxu0
        %v904 = vadd.f32 %v670, %v903
        %905 = vmatprep.mubr.bf16.mxu0 %v622
        %906 = vmatmul.mubr.bf16.gmra.mxu0 %v621
        %v907 = vpop.f32.mrf.mxu0
        %v908 = vadd.f32 %v666, %v907
        %v909 = vpop.f32.mrf.mxu0
        %v910 = vadd.f32 %v670, %v909
        %v911 = vpop.f32.mrf.mxu0
        %v912 = vadd.f32 %v666, %v911
        %v913 = vpop.f32.mrf.mxu0
        %v914 = vadd.f32 %v670, %v913
        %915 = vmatprep.mubr.bf16.mxu0 %v624
        %916 = vmatmul.mubr.bf16.gmra.mxu0 %v623
        %v917 = vpop.f32.mrf.mxu0
        %v918 = vadd.f32 %v666, %v917
        %v919 = vpop.f32.mrf.mxu0
        %v920 = vadd.f32 %v670, %v919
        %v921 = vpop.f32.mrf.mxu0
        %v922 = vadd.f32 %v666, %v921
        %v923 = vpop.f32.mrf.mxu0
        %v924 = vadd.f32 %v670, %v923
        %925 = vmatprep.mubr.bf16.mxu0 %v626
        %926 = vmatmul.mubr.bf16.gmra.mxu0 %v625
        %v927 = vpop.f32.mrf.mxu0
        %v928 = vadd.f32 %v666, %v927
        %v929 = vpop.f32.mrf.mxu0
        %v930 = vadd.f32 %v670, %v929
        %v931 = vpop.f32.mrf.mxu0
        %v932 = vadd.f32 %v666, %v931
        %v933 = vpop.f32.mrf.mxu0
        %v934 = vadd.f32 %v670, %v933
        %935 = vmatprep.mubr.bf16.mxu0 %v628
        %936 = vmatmul.mubr.bf16.gmra.mxu0 %v627
        %v937 = vpop.f32.mrf.mxu0
        %v938 = vadd.f32 %v666, %v937
        %v939 = vpop.f32.mrf.mxu0
        %v940 = vadd.f32 %v670, %v939
        %v941 = vpop.f32.mrf.mxu0
        %v942 = vadd.f32 %v666, %v941
        %v943 = vpop.f32.mrf.mxu0
        %v944 = vadd.f32 %v670, %v943
        %945 = vdwg.mxu0
        %v946 = vmax.f32 %v868, 0.0
        %v947 = vmax.f32 %v870, 0.0
        %v948 = vmax.f32 %v872, 0.0
        %v949 = vmax.f32 %v874, 0.0
        %v950 = vmax.f32 %v878, 0.0
        %v951 = vmax.f32 %v880, 0.0
        %v952 = vmax.f32 %v882, 0.0
        %v953 = vmax.f32 %v884, 0.0
        %v954 = vmax.f32 %v888, 0.0
        %v955 = vmax.f32 %v890, 0.0
        %v956 = vmax.f32 %v892, 0.0
        %v957 = vmax.f32 %v894, 0.0
        %v958 = vmax.f32 %v898, 0.0
        %v959 = vmax.f32 %v900, 0.0
        %v960 = vmax.f32 %v902, 0.0
        %v961 = vmax.f32 %v904, 0.0
        %v962 = vmax.f32 %v908, 0.0
        %v963 = vmax.f32 %v910, 0.0
        %v964 = vmax.f32 %v912, 0.0
        %v965 = vmax.f32 %v914, 0.0
        %v966 = vmax.f32 %v918, 0.0
        %v967 = vmax.f32 %v920, 0.0
        %v968 = vmax.f32 %v922, 0.0
        %v969 = vmax.f32 %v924, 0.0
        %v970 = vmax.f32 %v928, 0.0
        %v971 = vmax.f32 %v930, 0.0
        %v972 = vmax.f32 %v932, 0.0
        %v973 = vmax.f32 %v934, 0.0
        %v974 = vmax.f32 %v938, 0.0
        %v975 = vmax.f32 %v940, 0.0
        %v976 = vmax.f32 %v942, 0.0
        %v977 = vmax.f32 %v944, 0.0
        %v978 = vpack.c.bf16 %v948, %v946
        %v979 = vpack.c.bf16 %v949, %v947
        %v980 = vpack.c.bf16 %v952, %v950
        %v981 = vpack.c.bf16 %v953, %v951
        %v982 = vpack.c.bf16 %v956, %v954
        %v983 = vpack.c.bf16 %v957, %v955
        %v984 = vpack.c.bf16 %v960, %v958
        %v985 = vpack.c.bf16 %v961, %v959
        %v986 = vpack.c.bf16 %v964, %v962
        %v987 = vpack.c.bf16 %v965, %v963
        %v988 = vpack.c.bf16 %v968, %v966
        %v989 = vpack.c.bf16 %v969, %v967
        %v990 = vpack.c.bf16 %v972, %v970
        %v991 = vpack.c.bf16 %v973, %v971
        %v992 = vpack.c.bf16 %v976, %v974
        %v993 = vpack.c.bf16 %v977, %v975
        %v994 = vld [vmem:[#allocation2] sm:$0xf]
        %v995 = vld [vmem:[#allocation2 + $0x4] sm:$0xf]
        %v996 = vld [vmem:[#allocation2 + $0x8] sm:$0xf]
        %v997 = vld [vmem:[#allocation2 + $0xc] sm:$0xf]
        %v998 = vld [vmem:[#allocation2 + $0x10] sm:$0xf]
        %v999 = vld [vmem:[#allocation2 + $0x14] sm:$0xf]
        %v1000 = vld [vmem:[#allocation2 + $0x18] sm:$0xf]
        %v1001 = vld [vmem:[#allocation2 + $0x1c] sm:$0xf]
        %v1002 = vld [vmem:[#allocation2 + $0x20] sm:$0xf]
        %v1003 = vld [vmem:[#allocation2 + $0x24] sm:$0xf]
        %v1004 = vld [vmem:[#allocation2 + $0x28] sm:$0xf]
        %v1005 = vld [vmem:[#allocation2 + $0x2c] sm:$0xf]
        %v1006 = vld [vmem:[#allocation2 + $0x30] sm:$0xf]
        %v1007 = vld [vmem:[#allocation2 + $0x34] sm:$0xf]
        %v1008 = vld [vmem:[#allocation2 + $0x38] sm:$0xf]
        %v1009 = vld [vmem:[#allocation2 + $0x3c] sm:$0xf]
        %v1010 = vld [vmem:[#allocation2 + $0x40] sm:$0xf]
        %v1011 = vld [vmem:[#allocation2 + $0x44] sm:$0xf]
        %v1012 = vld [vmem:[#allocation2 + $0x48] sm:$0xf]
        %v1013 = vld [vmem:[#allocation2 + $0x4c] sm:$0xf]
        %v1014 = vld [vmem:[#allocation2 + $0x50] sm:$0xf]
        %v1015 = vld [vmem:[#allocation2 + $0x54] sm:$0xf]
        %v1016 = vld [vmem:[#allocation2 + $0x58] sm:$0xf]
        %v1017 = vld [vmem:[#allocation2 + $0x5c] sm:$0xf]
        %v1018 = vld [vmem:[#allocation2 + $0x60] sm:$0xf]
        %v1019 = vld [vmem:[#allocation2 + $0x64] sm:$0xf]
        %v1020 = vld [vmem:[#allocation2 + $0x68] sm:$0xf]
        %v1021 = vld [vmem:[#allocation2 + $0x6c] sm:$0xf]
        %v1022 = vld [vmem:[#allocation2 + $0x70] sm:$0xf]
        %v1023 = vld [vmem:[#allocation2 + $0x74] sm:$0xf]
        %v1024 = vld [vmem:[#allocation2 + $0x78] sm:$0xf]
        %v1025 = vld [vmem:[#allocation2 + $0x7c] sm:$0xf]
        %v1026 = vld [vmem:[%s4] sm:$0x1]
        %v1028 = vlaneseq
        %v1029 = vshrl.u32 %v1028, 7
        %v1030 = vsub.s32 0, %v1029
        %v1031 = vrot.slane %v1026, %v1030
        %v1065 = vunpack.c.l.b16 %v994
        %v1066 = vunpack.c.l.b16 %v995
        %v1067 = vunpack.c.l.b16 %v996
        %v1068 = vunpack.c.l.b16 %v997
        %v1069 = vunpack.c.l.b16 %v998
        %v1070 = vunpack.c.l.b16 %v999
        %v1071 = vunpack.c.l.b16 %v1000
        %v1072 = vunpack.c.l.b16 %v1001
        %v1073 = vunpack.c.l.b16 %v1002
        %v1074 = vunpack.c.l.b16 %v1003
        %v1075 = vunpack.c.l.b16 %v1004
        %v1076 = vunpack.c.l.b16 %v1005
        %v1077 = vunpack.c.l.b16 %v1006
        %v1078 = vunpack.c.l.b16 %v1007
        %v1079 = vunpack.c.l.b16 %v1008
        %v1080 = vunpack.c.l.b16 %v1009
        %v1081 = vunpack.c.l.b16 %v1010
        %v1082 = vunpack.c.l.b16 %v1011
        %v1083 = vunpack.c.l.b16 %v1012
        %v1084 = vunpack.c.l.b16 %v1013
        %v1085 = vunpack.c.l.b16 %v1014
        %v1086 = vunpack.c.l.b16 %v1015
        %v1087 = vunpack.c.l.b16 %v1016
        %v1088 = vunpack.c.l.b16 %v1017
        %v1089 = vunpack.c.l.b16 %v1018
        %v1090 = vunpack.c.l.b16 %v1019
        %v1091 = vunpack.c.l.b16 %v1020
        %v1092 = vunpack.c.l.b16 %v1021
        %v1093 = vunpack.c.l.b16 %v1022
        %v1094 = vunpack.c.l.b16 %v1023
        %v1095 = vunpack.c.l.b16 %v1024
        %v1096 = vunpack.c.l.b16 %v1025
        %v1097 = vpack.c.b16 %v1066, %v1065
        %v1098 = vpack.c.b16 %v1068, %v1067
        %v1099 = vpack.c.b16 %v1070, %v1069
        %v1100 = vpack.c.b16 %v1072, %v1071
        %v1101 = vpack.c.b16 %v1074, %v1073
        %v1102 = vpack.c.b16 %v1076, %v1075
        %v1103 = vpack.c.b16 %v1078, %v1077
        %v1104 = vpack.c.b16 %v1080, %v1079
        %v1105 = vpack.c.b16 %v1082, %v1081
        %v1106 = vpack.c.b16 %v1084, %v1083
        %v1107 = vpack.c.b16 %v1086, %v1085
        %v1108 = vpack.c.b16 %v1088, %v1087
        %v1109 = vpack.c.b16 %v1090, %v1089
        %v1110 = vpack.c.b16 %v1092, %v1091
        %v1111 = vpack.c.b16 %v1094, %v1093
        %v1112 = vpack.c.b16 %v1096, %v1095
        %1129 = vmatprep.subr.bf16.mxu0 0
        %1130 = vmatpush1.bf16.msra.mxu0 %v1104
        %1131 = vmatprep.subr.bf16.mxu0 0
        %1132 = vmatpush1.bf16.msra.mxu0 %v1103
        %1133 = vmatprep.subr.bf16.mxu0 0
        %1134 = vmatpush1.bf16.msra.mxu0 %v1102
        %1135 = vmatprep.subr.bf16.mxu0 0
        %1136 = vmatpush1.bf16.msra.mxu0 %v1101
        %1137 = vmatprep.subr.bf16.mxu0 0
        %1138 = vmatpush1.bf16.msra.mxu0 %v1100
        %1139 = vmatprep.subr.bf16.mxu0 0
        %1140 = vmatpush1.bf16.msra.mxu0 %v1099
        %1141 = vmatprep.subr.bf16.mxu0 0
        %1142 = vmatpush1.bf16.msra.mxu0 %v1098
        %1143 = vmatprep.subr.bf16.mxu0 0
        %1144 = vmatpush1.bf16.msra.mxu0 %v1097
        %1145 = vmatprep.subr.bf16.mxu0 0
        %1146 = vmatpush2.bf16.msra.mxu0 %v1112
        %1147 = vmatprep.subr.bf16.mxu0 0
        %1148 = vmatpush2.bf16.msra.mxu0 %v1111
        %1149 = vmatprep.subr.bf16.mxu0 0
        %1150 = vmatpush2.bf16.msra.mxu0 %v1110
        %1151 = vmatprep.subr.bf16.mxu0 0
        %1152 = vmatpush2.bf16.msra.mxu0 %v1109
        %1153 = vmatprep.subr.bf16.mxu0 0
        %1154 = vmatpush2.bf16.msra.mxu0 %v1108
        %1155 = vmatprep.subr.bf16.mxu0 0
        %1156 = vmatpush2.bf16.msra.mxu0 %v1107
        %1157 = vmatprep.subr.bf16.mxu0 0
        %1158 = vmatpush2.bf16.msra.mxu0 %v1106
        %1159 = vmatprep.subr.bf16.mxu0 0
        %1160 = vmatpush2.bf16.msra.mxu0 %v1105
        %1161 = vmatprep.mubr.bf16.mxu0 %v979
        %1162 = vmatmul.mubr.bf16.gmra.mxu0 %v978
        %v1163 = vpop.f32.mrf.mxu0
        %v1164 = vadd.f32 %v1031, %v1163
        %v1165 = vpop.f32.mrf.mxu0
        %v1166 = vpop.f32.mrf.mxu0
        %v1167 = vadd.f32 %v1031, %v1166
        %v1168 = vpop.f32.mrf.mxu0
        %1169 = vmatprep.mubr.bf16.mxu0 %v981
        %1170 = vmatmul.mubr.bf16.gmra.mxu0 %v980
        %v1171 = vpop.f32.mrf.mxu0
        %v1172 = vadd.f32 %v1031, %v1171
        %v1173 = vpop.f32.mrf.mxu0
        %v1174 = vpop.f32.mrf.mxu0
        %v1175 = vadd.f32 %v1031, %v1174
        %v1176 = vpop.f32.mrf.mxu0
        %1177 = vmatprep.mubr.bf16.mxu0 %v983
        %1178 = vmatmul.mubr.bf16.gmra.mxu0 %v982
        %v1179 = vpop.f32.mrf.mxu0
        %v1180 = vadd.f32 %v1031, %v1179
        %v1181 = vpop.f32.mrf.mxu0
        %v1182 = vpop.f32.mrf.mxu0
        %v1183 = vadd.f32 %v1031, %v1182
        %v1184 = vpop.f32.mrf.mxu0
        %1185 = vmatprep.mubr.bf16.mxu0 %v985
        %1186 = vmatmul.mubr.bf16.gmra.mxu0 %v984
        %v1187 = vpop.f32.mrf.mxu0
        %v1188 = vadd.f32 %v1031, %v1187
        %v1189 = vpop.f32.mrf.mxu0
        %v1190 = vpop.f32.mrf.mxu0
        %v1191 = vadd.f32 %v1031, %v1190
        %v1192 = vpop.f32.mrf.mxu0
        %1193 = vmatprep.mubr.bf16.mxu0 %v987
        %1194 = vmatmul.mubr.bf16.gmra.mxu0 %v986
        %v1195 = vpop.f32.mrf.mxu0
        %v1196 = vadd.f32 %v1031, %v1195
        %v1197 = vpop.f32.mrf.mxu0
        %v1198 = vpop.f32.mrf.mxu0
        %v1199 = vadd.f32 %v1031, %v1198
        %v1200 = vpop.f32.mrf.mxu0
        %1201 = vmatprep.mubr.bf16.mxu0 %v989
        %1202 = vmatmul.mubr.bf16.gmra.mxu0 %v988
        %v1203 = vpop.f32.mrf.mxu0
        %v1204 = vadd.f32 %v1031, %v1203
        %v1205 = vpop.f32.mrf.mxu0
        %v1206 = vpop.f32.mrf.mxu0
        %v1207 = vadd.f32 %v1031, %v1206
        %v1208 = vpop.f32.mrf.mxu0
        %1209 = vmatprep.mubr.bf16.mxu0 %v991
        %1210 = vmatmul.mubr.bf16.gmra.mxu0 %v990
        %v1211 = vpop.f32.mrf.mxu0
        %v1212 = vadd.f32 %v1031, %v1211
        %v1213 = vpop.f32.mrf.mxu0
        %v1214 = vpop.f32.mrf.mxu0
        %v1215 = vadd.f32 %v1031, %v1214
        %v1216 = vpop.f32.mrf.mxu0
        %1217 = vmatprep.mubr.bf16.mxu0 %v993
        %1218 = vmatmul.mubr.bf16.gmra.mxu0 %v992
        %v1219 = vpop.f32.mrf.mxu0
        %v1220 = vadd.f32 %v1031, %v1219
        %v1221 = vpop.f32.mrf.mxu0
        %v1222 = vpop.f32.mrf.mxu0
        %v1223 = vadd.f32 %v1031, %v1222
        %v1224 = vpop.f32.mrf.mxu0
        %1225 = vdwg.mxu0
        %1226 = vmax.xlane.f32.xlu0 %v1164
        %v1227 = vpop.xlane.xlu0 %1226
        %1228 = vmax.xlane.f32.xlu0 %v1167
        %v1229 = vpop.xlane.xlu0 %1228
        %1230 = vmax.xlane.f32.xlu0 %v1172
        %v1231 = vpop.xlane.xlu0 %1230
        %1232 = vmax.xlane.f32.xlu0 %v1175
        %v1233 = vpop.xlane.xlu0 %1232
        %1234 = vmax.xlane.f32.xlu0 %v1180
        %v1235 = vpop.xlane.xlu0 %1234
        %1236 = vmax.xlane.f32.xlu0 %v1183
        %v1237 = vpop.xlane.xlu0 %1236
        %1238 = vmax.xlane.f32.xlu0 %v1188
        %v1239 = vpop.xlane.xlu0 %1238
        %1240 = vmax.xlane.f32.xlu0 %v1191
        %v1241 = vpop.xlane.xlu0 %1240
        %1242 = vmax.xlane.f32.xlu0 %v1196
        %v1243 = vpop.xlane.xlu0 %1242
        %1244 = vmax.xlane.f32.xlu0 %v1199
        %v1245 = vpop.xlane.xlu0 %1244
        %1246 = vmax.xlane.f32.xlu0 %v1204
        %v1247 = vpop.xlane.xlu0 %1246
        %1248 = vmax.xlane.f32.xlu0 %v1207
        %v1249 = vpop.xlane.xlu0 %1248
        %1250 = vmax.xlane.f32.xlu0 %v1212
        %v1251 = vpop.xlane.xlu0 %1250
        %1252 = vmax.xlane.f32.xlu0 %v1215
        %v1253 = vpop.xlane.xlu0 %1252
        %1254 = vmax.xlane.f32.xlu0 %v1220
        %v1255 = vpop.xlane.xlu0 %1254
        %1256 = vmax.xlane.f32.xlu0 %v1223
        %v1257 = vpop.xlane.xlu0 %1256
        %v1258 = vsub.f32 %v1164, %v1227
        %v1259 = vsub.f32 %v1167, %v1229
        %v1260 = vsub.f32 %v1172, %v1231
        %v1261 = vsub.f32 %v1175, %v1233
        %v1262 = vsub.f32 %v1180, %v1235
        %v1263 = vsub.f32 %v1183, %v1237
        %v1264 = vsub.f32 %v1188, %v1239
        %v1265 = vsub.f32 %v1191, %v1241
        %v1266 = vsub.f32 %v1196, %v1243
        %v1267 = vsub.f32 %v1199, %v1245
        %v1268 = vsub.f32 %v1204, %v1247
        %v1269 = vsub.f32 %v1207, %v1249
        %v1270 = vsub.f32 %v1212, %v1251
        %v1271 = vsub.f32 %v1215, %v1253
        %v1272 = vsub.f32 %v1220, %v1255
        %v1273 = vsub.f32 %v1223, %v1257
        %v1274 = vmul.f32 %v1258, 1.442695
        %v1275 = vpow.pop %v1274
        %v1276 = vmul.f32 %v1259, 1.442695
        %v1277 = vpow.pop %v1276
        %v1278 = vmul.f32 %v1260, 1.442695
        %v1279 = vpow.pop %v1278
        %v1280 = vmul.f32 %v1261, 1.442695
        %v1281 = vpow.pop %v1280
        %v1282 = vmul.f32 %v1262, 1.442695
        %v1283 = vpow.pop %v1282
        %v1284 = vmul.f32 %v1263, 1.442695
        %v1285 = vpow.pop %v1284
        %v1286 = vmul.f32 %v1264, 1.442695
        %v1287 = vpow.pop %v1286
        %v1288 = vmul.f32 %v1265, 1.442695
        %v1289 = vpow.pop %v1288
        %v1290 = vmul.f32 %v1266, 1.442695
        %v1291 = vpow.pop %v1290
        %v1292 = vmul.f32 %v1267, 1.442695
        %v1293 = vpow.pop %v1292
        %v1294 = vmul.f32 %v1268, 1.442695
        %v1295 = vpow.pop %v1294
        %v1296 = vmul.f32 %v1269, 1.442695
        %v1297 = vpow.pop %v1296
        %v1298 = vmul.f32 %v1270, 1.442695
        %v1299 = vpow.pop %v1298
        %v1300 = vmul.f32 %v1271, 1.442695
        %v1301 = vpow.pop %v1300
        %v1302 = vmul.f32 %v1272, 1.442695
        %v1303 = vpow.pop %v1302
        %v1304 = vmul.f32 %v1273, 1.442695
        %v1305 = vpow.pop %v1304
        %1306 = vadd.xlane.f32.xlu0 %v1275
        %v1307 = vpop.xlane.xlu0 %1306
        %1308 = vadd.xlane.f32.xlu0 %v1277
        %v1309 = vpop.xlane.xlu0 %1308
        %1310 = vadd.xlane.f32.xlu0 %v1279
        %v1311 = vpop.xlane.xlu0 %1310
        %1312 = vadd.xlane.f32.xlu0 %v1281
        %v1313 = vpop.xlane.xlu0 %1312
        %1314 = vadd.xlane.f32.xlu0 %v1283
        %v1315 = vpop.xlane.xlu0 %1314
        %1316 = vadd.xlane.f32.xlu0 %v1285
        %v1317 = vpop.xlane.xlu0 %1316
        %1318 = vadd.xlane.f32.xlu0 %v1287
        %v1319 = vpop.xlane.xlu0 %1318
        %1320 = vadd.xlane.f32.xlu0 %v1289
        %v1321 = vpop.xlane.xlu0 %1320
        %1322 = vadd.xlane.f32.xlu0 %v1291
        %v1323 = vpop.xlane.xlu0 %1322
        %1324 = vadd.xlane.f32.xlu0 %v1293
        %v1325 = vpop.xlane.xlu0 %1324
        %1326 = vadd.xlane.f32.xlu0 %v1295
        %v1327 = vpop.xlane.xlu0 %1326
        %1328 = vadd.xlane.f32.xlu0 %v1297
        %v1329 = vpop.xlane.xlu0 %1328
        %1330 = vadd.xlane.f32.xlu0 %v1299
        %v1331 = vpop.xlane.xlu0 %1330
        %1332 = vadd.xlane.f32.xlu0 %v1301
        %v1333 = vpop.xlane.xlu0 %1332
        %1334 = vadd.xlane.f32.xlu0 %v1303
        %v1335 = vpop.xlane.xlu0 %1334
        %1336 = vadd.xlane.f32.xlu0 %v1305
        %v1337 = vpop.xlane.xlu0 %1336
        %v1338 = vlog2.pop %v1307
        %v1339 = vmul.f32 %v1338, 0.6931472
        %v1340 = vlog2.pop %v1309
        %v1341 = vmul.f32 %v1340, 0.6931472
        %v1342 = vlog2.pop %v1311
        %v1343 = vmul.f32 %v1342, 0.6931472
        %v1344 = vlog2.pop %v1313
        %v1345 = vmul.f32 %v1344, 0.6931472
        %v1346 = vlog2.pop %v1315
        %v1347 = vmul.f32 %v1346, 0.6931472
        %v1348 = vlog2.pop %v1317
        %v1349 = vmul.f32 %v1348, 0.6931472
        %v1350 = vlog2.pop %v1319
        %v1351 = vmul.f32 %v1350, 0.6931472
        %v1352 = vlog2.pop %v1321
        %v1353 = vmul.f32 %v1352, 0.6931472
        %v1354 = vlog2.pop %v1323
        %v1355 = vmul.f32 %v1354, 0.6931472
        %v1356 = vlog2.pop %v1325
        %v1357 = vmul.f32 %v1356, 0.6931472
        %v1358 = vlog2.pop %v1327
        %v1359 = vmul.f32 %v1358, 0.6931472
        %v1360 = vlog2.pop %v1329
        %v1361 = vmul.f32 %v1360, 0.6931472
        %v1362 = vlog2.pop %v1331
        %v1363 = vmul.f32 %v1362, 0.6931472
        %v1364 = vlog2.pop %v1333
        %v1365 = vmul.f32 %v1364, 0.6931472
        %v1366 = vlog2.pop %v1335
        %v1367 = vmul.f32 %v1366, 0.6931472
        %v1368 = vlog2.pop %v1337
        %v1369 = vmul.f32 %v1368, 0.6931472
        %v1370 = vsub.f32 %v1258, %v1339
        %v1371 = vsub.f32 %v1259, %v1341
        %v1372 = vsub.f32 %v1260, %v1343
        %v1373 = vsub.f32 %v1261, %v1345
        %v1374 = vsub.f32 %v1262, %v1347
        %v1375 = vsub.f32 %v1263, %v1349
        %v1376 = vsub.f32 %v1264, %v1351
        %v1377 = vsub.f32 %v1265, %v1353
        %v1378 = vsub.f32 %v1266, %v1355
        %v1379 = vsub.f32 %v1267, %v1357
        %v1380 = vsub.f32 %v1268, %v1359
        %v1381 = vsub.f32 %v1269, %v1361
        %v1382 = vsub.f32 %v1270, %v1363
        %v1383 = vsub.f32 %v1271, %v1365
        %v1384 = vsub.f32 %v1272, %v1367
        %v1385 = vsub.f32 %v1273, %v1369
        %1386 = vst [vmem:[%s233] sm:$0xff] %v1370
        %1387 = vst [vmem:[%s233 + $0x8] sm:$0xff] %v1371
        %1388 = vst [vmem:[%s233 + $0x10] sm:$0xff] %v1372
        %1389 = vst [vmem:[%s233 + $0x18] sm:$0xff] %v1373
        %1390 = vst [vmem:[%s233 + $0x20] sm:$0xff] %v1374
        %1391 = vst [vmem:[%s233 + $0x28] sm:$0xff] %v1375
        %1392 = vst [vmem:[%s233 + $0x30] sm:$0xff] %v1376
        %1393 = vst [vmem:[%s233 + $0x38] sm:$0xff] %v1377
        %1394 = vst [vmem:[%s233 + $0x40] sm:$0xff] %v1378
        %1395 = vst [vmem:[%s233 + $0x48] sm:$0xff] %v1379
        %1396 = vst [vmem:[%s233 + $0x50] sm:$0xff] %v1380
        %1397 = vst [vmem:[%s233 + $0x58] sm:$0xff] %v1381
        %1398 = vst [vmem:[%s233 + $0x60] sm:$0xff] %v1382
        %1399 = vst [vmem:[%s233 + $0x68] sm:$0xff] %v1383
        %1400 = vst [vmem:[%s233 + $0x70] sm:$0xff] %v1384
        %1401 = vst [vmem:[%s233 + $0x78] sm:$0xff] %v1385
        %s1402 = sand.u32 %s138, 1
        %s1403 = scalar_lea.sflag [#allocation4], %s1402
        %s1404 = sand.u32 %s138, 1
        %s1405 = smul.addr %s1404, 128
        %s1406 = scalar_lea.vmem [#allocation5], %s1405
        // Predicated region
        $region45: #{ngram_forward.1} parent=39 // pred_check
          %p1407 = pneg %p148
        $region46: #{ngram_forward.1} parent=39 // pred_check_branch
          %1409 = sbr.rel (%p1407) target = $region48
        $region47: #{ngram_forward.1} parent=39 // pred_region
          %s1410 = smul.u32 16, %s20
          %s1412 = ssub.s32 2048, 2048
          %1413 = vsyncadd %s1403, %s1412
          %s1414 = smul.addr %s1410, 128
          %s1415 = scalar_lea.hbm %s5, %s1414
          %s1416 = sshll.u32 %s1406, 4
          %s1417 = int_to_ptr.vmem [resolvable:$true] %s1416
          %1422 = dma.vmem_to_hbm [thread:$0]  %s1417, 2048, %s1415, %s1403, 128, 128, 8
        $region48: #{ngram_forward.1} parent=39 // pred_fallthru
          _
      $region40: #{ngram_forward.1} parent=5 // pred_fallthru
        _
      %p1423 = scmp.le.s32.totalorder 2, %s15
      // Predicated region
      $region49: #{ngram_forward.1} parent=5 // pred_check
        %p1424 = pneg %p1423
      $region50: #{ngram_forward.1} parent=5 // pred_check_branch
        %1426 = sbr.rel (%p1424) target = $region52
      $region51: #{ngram_forward.1} parent=5 // pred_region
        %s1427 = ssub.s32 %s15, 2
        // Predicated region
        $region53: #{ngram_forward.1} parent=51 // pred_check
          %p1428 = pneg %p154
        $region54: #{ngram_forward.1} parent=51 // pred_check_branch
          %1430 = sbr.rel (%p1428) target = $region56
        $region55: #{ngram_forward.1} parent=51 // pred_region
          %s1431 = sand.u32 %s139, 1
          %s1432 = scalar_lea.sflag [#allocation4], %s1431
          %s1433 = sand.u32 %s139, 1
          %s1434 = smul.addr %s1433, 128
          %s1435 = scalar_lea.vmem [#allocation5], %s1434
          %1436 = dma.done %s1432, 2048
        $region56: #{ngram_forward.1} parent=51 // pred_fallthru
          _
      $region52: #{ngram_forward.1} parent=5 // pred_fallthru
        _
    $region6: #{ngram_forward.1} parent=1 // loop_footer
      %s19 = sadd.s32 1, %s15
    $region7: #{ngram_forward.1} parent=1 // loop_footer_branch
      %14 = sbr.rel target = $region3
    $region8: #{ngram_forward.1} parent=1 // loop_exit
      _
    %1437 = vsyncpa [#allocation3], 1
    %s1438 = scalar_lea.sflag [#allocation3], 1
    %1439 = vsyncpa %s1438, 1
    %1440 = vsyncpa [#allocation4], 1
    %s1441 = scalar_lea.sflag [#allocation4], 1
    %1442 = vsyncpa %s1441, 1

</llo_original>
